<compile_context>
chip_gen: v7x
topology: tpu7x:2x2x1
jax: 0.10.0
libtpu: 0.0.40
codegen_flags: <defaults>
</compile_context>

<pallas_src>
import functools

import jax
import jax.numpy as jnp
from jax.experimental import pallas as pl
from jax.experimental.pallas import tpu as pltpu


LANE = 128  # TPU lane width; pad feature dims to this for lane-dense layouts.


def _qfunc_kernel(x_ref, w1_ref, b1_ref, w2_ref, b2_ref, w3_ref, b3_ref, o_ref):
    """Fused MLP forward on one batch tile.

    All three matmuls hit the MXU (f32 accumulation), the tanh activations go to
    the EUP, and the hidden state stays in vregs/VMEM (never written back to HBM).
    Feature dims of the hidden/output tensors are 128-padded -> lane-dense.
    """
    x = x_ref[...]

    h = jnp.dot(x, w1_ref[...], preferred_element_type=jnp.float32) + b1_ref[...]
    h = jnp.tanh(h)

    h = jnp.dot(h, w2_ref[...], preferred_element_type=jnp.float32) + b2_ref[...]
    h = jnp.tanh(h)

    # Final linear layer has no activation (matches the nn.Sequential structure).
    o = jnp.dot(h, w3_ref[...], preferred_element_type=jnp.float32) + b3_ref[...]
    o_ref[...] = o.astype(o_ref.dtype)


def _round_up(n, m):
    return ((n + m - 1) // m) * m


def _pad_axis_to(a, axis, target):
    pad = target - a.shape[axis]
    if pad <= 0:
        return a
    widths = [(0, 0)] * a.ndim
    widths[axis] = (0, pad)
    return jnp.pad(a, widths)


def _choose_block_b(batch):
    """Pick the batch tile.

    * batch <= 1024: one grid step covering the whole batch (step overhead dominates).
    * batch  > 1024: tiles up to 4096 rows, but capped at ceil(batch/2) so there are
      always >= 2 independent ("parallel") steps for v7x's two TensorCores, while
      v5e/v6e just loop over a few large MXU-filling tiles.
    VMEM footprint per 4096-row tile (x + out + intermediates, f32) is only a few
    MiB — far below the scoped default on every generation.
    """
    if batch <= 1024:
        return _round_up(batch, 8)
    return min(4096, _round_up(-(-batch // 2), 8))


@functools.partial(jax.jit, static_argnames=("block_b",))
def qfunc_forward(x, params, *, block_b=None):
    """Run the fused QFunc MLP. x: (B, D_in) float32. params: dict of weights."""
    B, d_in = x.shape
    h1 = params["w1"].shape[1]
    h2 = params["w2"].shape[1]
    d_out = params["w3"].shape[1]

    # Zero-pad hidden/output feature dims to the 128-lane width (weights are tiny,
    # so this per-call padding is negligible).  D_in is left as-is.
    h1p, h2p, d_out_p = _round_up(h1, LANE), _round_up(h2, LANE), _round_up(d_out, LANE)
    w1 = _pad_axis_to(params["w1"], 1, h1p)
    b1 = _pad_axis_to(params["b1"], 1, h1p)
    w2 = _pad_axis_to(_pad_axis_to(params["w2"], 0, h1p), 1, h2p)
    b2 = _pad_axis_to(params["b2"], 1, h2p)
    w3 = _pad_axis_to(_pad_axis_to(params["w3"], 0, h2p), 1, d_out_p)
    b3 = _pad_axis_to(params["b3"], 1, d_out_p)

    if block_b is None:
        block_b = _choose_block_b(B)
    # Tile must be a multiple of 8 sublanes and no bigger than the rounded batch.
    block_b = max(8, _round_up(min(block_b, _round_up(B, 8)), 8))

    # No batch padding of x: the grid over-covers B and Pallas clamps the tail tile
    # (OOB tail rows are independent garbage that is never written to valid rows).
    num_steps = pl.cdiv(B, block_b)
    grid = (num_steps,)

    def weight_spec(shape):
        return pl.BlockSpec(shape, lambda i: (0, 0))

    out = pl.pallas_call(
        _qfunc_kernel,
        out_shape=jax.ShapeDtypeStruct((B, d_out_p), jnp.float32),
        grid=grid,
        in_specs=[
            pl.BlockSpec((block_b, d_in), lambda i: (i, 0)),   # x tile
            weight_spec((d_in, h1p)),                          # w1 (cols padded)
            weight_spec((1, h1p)),                             # b1
            weight_spec((h1p, h2p)),                           # w2
            weight_spec((1, h2p)),                             # b2
            weight_spec((h2p, d_out_p)),                       # w3
            weight_spec((1, d_out_p)),                         # b3
        ],
        out_specs=pl.BlockSpec((block_b, d_out_p), lambda i: (i, 0)),
        compiler_params=pltpu.CompilerParams(
            # Batch tiles are independent -> shard across TensorCores on v7x.
            dimension_semantics=("parallel",),
        ),
    )(x, w1, b1, w2, b2, w3, b3)

    # Drop the zero-padded output columns (small (B, d_out) copy).
    return out[:, :d_out]


def init_qfunc_params(key, input_size, hidden_size, output_size):
    """Deterministic synthetic init. Weights stored as (in, out); biases as (1, out)."""
    dims = [input_size] + list(hidden_size) + [output_size]
    params = {}
    for idx, (fan_in, fan_out) in enumerate(zip(dims[:-1], dims[1:]), start=1):
        key, kw, kb = jax.random.split(key, 3)
        bound = 1.0 / jnp.sqrt(fan_in)  # matches nn.Linear's uniform(-1/sqrt(in), 1/sqrt(in))
        params[f"w{idx}"] = jax.random.uniform(
            kw, (fan_in, fan_out), jnp.float32, -bound, bound)
        params[f"b{idx}"] = jax.random.uniform(
            kb, (1, fan_out), jnp.float32, -bound, bound)
    return params


def qfunc_reference(x, params):
    """Plain-JAX reference of the same MLP (for correctness check)."""
    hp = jax.lax.Precision.HIGHEST
    h = jnp.tanh(jnp.dot(x, params["w1"], precision=hp) + params["b1"])
    h = jnp.tanh(jnp.dot(h, params["w2"], precision=hp) + params["b2"])
    return jnp.dot(h, params["w3"], precision=hp) + params["b3"]


if __name__ == "__main__":
    # Small shapes consistent with QFunc(input_size=32, hidden_size=(64, 64), output_size=8)
    INPUT_SIZE = 32
    HIDDEN_SIZE = (64, 64)
    OUTPUT_SIZE = 8

    key = jax.random.PRNGKey(0)
    kparams, kx1, kx2 = jax.random.split(key, 3)
    params = init_qfunc_params(kparams, INPUT_SIZE, HIDDEN_SIZE, OUTPUT_SIZE)

    # Case 1: single-tile grid (B=128).
    x1 = jax.random.normal(kx1, (128, INPUT_SIZE), jnp.float32)
    out1 = jax.block_until_ready(qfunc_forward(x1, params))
    ref1 = qfunc_reference(x1, params)
    assert out1.shape == (128, OUTPUT_SIZE)
    assert jnp.allclose(out1, ref1, atol=1e-4, rtol=1e-4), "mismatch vs reference (B=128)"

    # Case 2: B=100 (not a multiple of 8) with a forced 64-row tile -> 2 grid steps
    # and a partial tail tile (exercises the clamped-boundary, no-jnp.pad path).
    x2 = jax.random.normal(kx2, (100, INPUT_SIZE), jnp.float32)
    out2 = jax.block_until_ready(qfunc_forward(x2, params, block_b=64))
    ref2 = qfunc_reference(x2, params)
    assert out2.shape == (100, OUTPUT_SIZE)
    assert jnp.allclose(out2, ref2, atol=1e-4, rtol=1e-4), "mismatch vs reference (B=100)"

    print("KERNEL_OK")
</pallas_src>

<mosaic_0001>
module attributes {stable_mosaic.version = 11 : i64} {
  func.func @_qfunc_kernel(%arg0: i32, %arg1: memref<128x32xf32, #tpu.memory_space<vmem>>, %arg2: memref<32x128xf32, #tpu.memory_space<vmem>>, %arg3: memref<1x128xf32, #tpu.memory_space<vmem>>, %arg4: memref<128x128xf32, #tpu.memory_space<vmem>>, %arg5: memref<1x128xf32, #tpu.memory_space<vmem>>, %arg6: memref<128x128xf32, #tpu.memory_space<vmem>>, %arg7: memref<1x128xf32, #tpu.memory_space<vmem>>, %arg8: memref<128x128xf32, #tpu.memory_space<vmem>>) attributes {dimension_semantics = [#tpu.dimension_semantics<parallel>], iteration_bounds = array<i64: 1>, scalar_prefetch = 0 : i64, scratch_operands = 0 : i64, tpu.core_type = #tpu.core_type<tc>, window_params = [{transform_indices = @transform_0, window_bounds = array<i64: 128, 32>}, {pipeline_mode = #tpu.pipeline_mode<synchronous>, transform_indices = @transform_1, window_bounds = array<i64: 32, 128>}, {pipeline_mode = #tpu.pipeline_mode<synchronous>, transform_indices = @transform_2, window_bounds = array<i64: 1, 128>}, {pipeline_mode = #tpu.pipeline_mode<synchronous>, transform_indices = @transform_3, window_bounds = array<i64: 128, 128>}, {pipeline_mode = #tpu.pipeline_mode<synchronous>, transform_indices = @transform_4, window_bounds = array<i64: 1, 128>}, {pipeline_mode = #tpu.pipeline_mode<synchronous>, transform_indices = @transform_5, window_bounds = array<i64: 128, 128>}, {pipeline_mode = #tpu.pipeline_mode<synchronous>, transform_indices = @transform_6, window_bounds = array<i64: 1, 128>}, {transform_indices = @transform_7, window_bounds = array<i64: 128, 128>}]} {
    %c0 = arith.constant 0 : index
    %c0_0 = arith.constant 0 : index
    %0 = vector.load %arg1[%c0, %c0_0] : memref<128x32xf32, #tpu.memory_space<vmem>>, vector<128x32xf32>
    %c0_1 = arith.constant 0 : index
    %c0_2 = arith.constant 0 : index
    %1 = vector.load %arg2[%c0_1, %c0_2] : memref<32x128xf32, #tpu.memory_space<vmem>>, vector<32x128xf32>
    %cst = arith.constant dense<0.000000e+00> : vector<128x128xf32>
    %2 = tpu.matmul %0, %1, %cst {dimension_numbers = #tpu.dot_dimension_numbers<[1], [0], [0], [1], [0, 0, 1, 1], [], []>} : vector<128x32xf32>, vector<32x128xf32>, vector<128x128xf32> -> vector<128x128xf32>
    %c0_3 = arith.constant 0 : index
    %c0_4 = arith.constant 0 : index
    %3 = vector.load %arg3[%c0_3, %c0_4] : memref<1x128xf32, #tpu.memory_space<vmem>>, vector<1x128xf32>
    %4 = vector.broadcast %3 : vector<1x128xf32> to vector<128x128xf32>
    %5 = arith.addf %2, %4 : vector<128x128xf32>
    %6 = math.tanh %5 : vector<128x128xf32>
    %c0_5 = arith.constant 0 : index
    %c0_6 = arith.constant 0 : index
    %7 = vector.load %arg4[%c0_5, %c0_6] : memref<128x128xf32, #tpu.memory_space<vmem>>, vector<128x128xf32>
    %cst_7 = arith.constant dense<0.000000e+00> : vector<128x128xf32>
    %8 = tpu.matmul %6, %7, %cst_7 {dimension_numbers = #tpu.dot_dimension_numbers<[1], [0], [0], [1], [0, 0, 1, 1], [], []>} : vector<128x128xf32>, vector<128x128xf32>, vector<128x128xf32> -> vector<128x128xf32>
    %c0_8 = arith.constant 0 : index
    %c0_9 = arith.constant 0 : index
    %9 = vector.load %arg5[%c0_8, %c0_9] : memref<1x128xf32, #tpu.memory_space<vmem>>, vector<1x128xf32>
    %10 = vector.broadcast %9 : vector<1x128xf32> to vector<128x128xf32>
    %11 = arith.addf %8, %10 : vector<128x128xf32>
    %12 = math.tanh %11 : vector<128x128xf32>
    %c0_10 = arith.constant 0 : index
    %c0_11 = arith.constant 0 : index
    %13 = vector.load %arg6[%c0_10, %c0_11] : memref<128x128xf32, #tpu.memory_space<vmem>>, vector<128x128xf32>
    %cst_12 = arith.constant dense<0.000000e+00> : vector<128x128xf32>
    %14 = tpu.matmul %12, %13, %cst_12 {dimension_numbers = #tpu.dot_dimension_numbers<[1], [0], [0], [1], [0, 0, 1, 1], [], []>} : vector<128x128xf32>, vector<128x128xf32>, vector<128x128xf32> -> vector<128x128xf32>
    %c0_13 = arith.constant 0 : index
    %c0_14 = arith.constant 0 : index
    %15 = vector.load %arg7[%c0_13, %c0_14] : memref<1x128xf32, #tpu.memory_space<vmem>>, vector<1x128xf32>
    %16 = vector.broadcast %15 : vector<1x128xf32> to vector<128x128xf32>
    %17 = arith.addf %14, %16 : vector<128x128xf32>
    %c0_15 = arith.constant 0 : index
    %c0_16 = arith.constant 0 : index
    %18 = vector.load %arg8[%c0_15, %c0_16] : memref<128x128xf32, #tpu.memory_space<vmem>>, vector<128x128xf32>
    tpu.vector_store %arg8[%c0_15, %c0_16], %17 {strides = array<i32>} : memref<128x128xf32, #tpu.memory_space<vmem>>, vector<128x128xf32>,
    return
  }
  func.func @transform_0(%arg0: i32) -> (i32, i32) {
    %c0_i32 = arith.constant 0 : i32
    %c0_i32_0 = arith.constant 0 : i32
    return %arg0, %c0_i32 : i32, i32
  }
  func.func @transform_1(%arg0: i32) -> (i32, i32) {
    %c0_i32 = arith.constant 0 : i32
    %c0_i32_0 = arith.constant 0 : i32
    %c0_i32_1 = arith.constant 0 : i32
    return %c0_i32, %c0_i32_0 : i32, i32
  }
  func.func @transform_2(%arg0: i32) -> (i32, i32) {
    %c0_i32 = arith.constant 0 : i32
    %c0_i32_0 = arith.constant 0 : i32
    %c0_i32_1 = arith.constant 0 : i32
    return %c0_i32, %c0_i32_0 : i32, i32
  }
  func.func @transform_3(%arg0: i32) -> (i32, i32) {
    %c0_i32 = arith.constant 0 : i32
    %c0_i32_0 = arith.constant 0 : i32
    %c0_i32_1 = arith.constant 0 : i32
    return %c0_i32, %c0_i32_0 : i32, i32
  }
  func.func @transform_4(%arg0: i32) -> (i32, i32) {
    %c0_i32 = arith.constant 0 : i32
    %c0_i32_0 = arith.constant 0 : i32
    %c0_i32_1 = arith.constant 0 : i32
    return %c0_i32, %c0_i32_0 : i32, i32
  }
  func.func @transform_5(%arg0: i32) -> (i32, i32) {
    %c0_i32 = arith.constant 0 : i32
    %c0_i32_0 = arith.constant 0 : i32
    %c0_i32_1 = arith.constant 0 : i32
    return %c0_i32, %c0_i32_0 : i32, i32
  }
  func.func @transform_6(%arg0: i32) -> (i32, i32) {
    %c0_i32 = arith.constant 0 : i32
    %c0_i32_0 = arith.constant 0 : i32
    %c0_i32_1 = arith.constant 0 : i32
    return %c0_i32, %c0_i32_0 : i32, i32
  }
  func.func @transform_7(%arg0: i32) -> (i32, i32) {
    %c0_i32 = arith.constant 0 : i32
    %c0_i32_0 = arith.constant 0 : i32
    return %arg0, %c0_i32 : i32, i32
  }
}

</mosaic_0001>

<llo_original>
// kernel: qfunc_forward.1
$region0: #{qfunc_forward.1}
  #allocation0 [shape = 'u32[]', space=smem, size = 0x4, offset = 0x4, fixed_abs, tag = 'smem constant byte address 0x4 - core index']
  #allocation1 [shape = 'u32[144,128]{1,0:T(1,128)}', space=vmem, size = 0x12000, scoped, tag = 'internal scratch']
  %s0 = inlined_call_operand.vmem [shape: f32[128,32], index: 0, kind: input, shape index: {}]
  %s1 = inlined_call_operand.vmem [shape: f32[32,128], index: 1, kind: input, shape index: {}]
  %s2 = inlined_call_operand.vmem [shape: f32[1,128], index: 2, kind: input, shape index: {}]
  %s3 = inlined_call_operand.vmem [shape: f32[128,128], index: 3, kind: input, shape index: {}]
  %s4 = inlined_call_operand.vmem [shape: f32[1,128], index: 4, kind: input, shape index: {}]
  %s5 = inlined_call_operand.vmem [shape: f32[128,128], index: 5, kind: input, shape index: {}]
  %s6 = inlined_call_operand.vmem [shape: f32[1,128], index: 6, kind: input, shape index: {}]
  %s7 = inlined_call_operand.vmem [shape: f32[128,128], index: 7, kind: output, shape index: {}]
  %s8 = sld [smem:[#allocation0]]
  $region38: #{qfunc_forward.1} parent=0
    _
  %s10 = ssub.s32 1, %s8
  %s11 = scalar_select 0, %s10, %s8
  // Predicated region
  $region2: #{qfunc_forward.1} parent=0 // pred_check
    _
  $region3: #{qfunc_forward.1} parent=0 // pred_check_branch
    %13 = sbr.rel (0) target = $region5
  $region4: #{qfunc_forward.1} parent=0 // pred_region
    _
  $region5: #{qfunc_forward.1} parent=0 // pred_fallthru
    _
  // Predicated region
  $region6: #{qfunc_forward.1} parent=0 // pred_check
    _
  $region7: #{qfunc_forward.1} parent=0 // pred_check_branch
    %15 = sbr.rel (0) target = $region9
  $region8: #{qfunc_forward.1} parent=0 // pred_region
    _
  $region9: #{qfunc_forward.1} parent=0 // pred_fallthru
    _
  // Predicated region
  $region10: #{qfunc_forward.1} parent=0 // pred_check
    _
  $region11: #{qfunc_forward.1} parent=0 // pred_check_branch
    %17 = sbr.rel (0) target = $region13
  $region12: #{qfunc_forward.1} parent=0 // pred_region
    _
  $region13: #{qfunc_forward.1} parent=0 // pred_fallthru
    _
  // Predicated region
  $region14: #{qfunc_forward.1} parent=0 // pred_check
    _
  $region15: #{qfunc_forward.1} parent=0 // pred_check_branch
    %19 = sbr.rel (0) target = $region17
  $region16: #{qfunc_forward.1} parent=0 // pred_region
    _
  $region17: #{qfunc_forward.1} parent=0 // pred_fallthru
    _
  // Predicated region
  $region18: #{qfunc_forward.1} parent=0 // pred_check
    _
  $region19: #{qfunc_forward.1} parent=0 // pred_check_branch
    %21 = sbr.rel (0) target = $region21
  $region20: #{qfunc_forward.1} parent=0 // pred_region
    _
  $region21: #{qfunc_forward.1} parent=0 // pred_fallthru
    _
  // Predicated region
  $region22: #{qfunc_forward.1} parent=0 // pred_check
    _
  $region23: #{qfunc_forward.1} parent=0 // pred_check_branch
    %23 = sbr.rel (0) target = $region25
  $region24: #{qfunc_forward.1} parent=0 // pred_region
    _
  $region25: #{qfunc_forward.1} parent=0 // pred_fallthru
    _
  // Predicated region
  $region26: #{qfunc_forward.1} parent=0 // pred_check
    _
  $region27: #{qfunc_forward.1} parent=0 // pred_check_branch
    %25 = sbr.rel (0) target = $region29
  $region28: #{qfunc_forward.1} parent=0 // pred_region
    _
  $region29: #{qfunc_forward.1} parent=0 // pred_fallthru
    _
  %v26 = vld [vmem:[%s0] sm:$0xff]
  %v27 = vld [vmem:[%s0 + $0x8] sm:$0xff]
  %v28 = vld [vmem:[%s0 + $0x10] sm:$0xff]
  %v29 = vld [vmem:[%s0 + $0x18] sm:$0xff]
  %v30 = vld [vmem:[%s0 + $0x20] sm:$0xff]
  %v31 = vld [vmem:[%s0 + $0x28] sm:$0xff]
  %v32 = vld [vmem:[%s0 + $0x30] sm:$0xff]
  %v33 = vld [vmem:[%s0 + $0x38] sm:$0xff]
  %v34 = vld [vmem:[%s0 + $0x40] sm:$0xff]
  %v35 = vld [vmem:[%s0 + $0x48] sm:$0xff]
  %v36 = vld [vmem:[%s0 + $0x50] sm:$0xff]
  %v37 = vld [vmem:[%s0 + $0x58] sm:$0xff]
  %v38 = vld [vmem:[%s0 + $0x60] sm:$0xff]
  %v39 = vld [vmem:[%s0 + $0x68] sm:$0xff]
  %v40 = vld [vmem:[%s0 + $0x70] sm:$0xff]
  %v41 = vld [vmem:[%s0 + $0x78] sm:$0xff]
  %v42 = vld [vmem:[%s1] sm:$0xff]
  %v43 = vld [vmem:[%s1 + $0x8] sm:$0xff]
  %v44 = vld [vmem:[%s1 + $0x10] sm:$0xff]
  %v45 = vld [vmem:[%s1 + $0x18] sm:$0xff]
  %v46 = vld [vmem:[%s2] sm:$0x1]
  %v48 = vlaneseq
  %v49 = vshrl.u32 %v48, 7
  %v50 = vsub.s32 0, %v49
  %v51 = vrot.slane %v46, %v50
  %vm53 = vcmask 261120
  %v55 = vsel %vm53, %v26, 0
  %v58 = vsel %vm53, %v27, 0
  %v61 = vsel %vm53, %v28, 0
  %v64 = vsel %vm53, %v29, 0
  %v67 = vsel %vm53, %v30, 0
  %v70 = vsel %vm53, %v31, 0
  %v73 = vsel %vm53, %v32, 0
  %v76 = vsel %vm53, %v33, 0
  %v79 = vsel %vm53, %v34, 0
  %v82 = vsel %vm53, %v35, 0
  %v85 = vsel %vm53, %v36, 0
  %v88 = vsel %vm53, %v37, 0
  %v91 = vsel %vm53, %v38, 0
  %v94 = vsel %vm53, %v39, 0
  %v97 = vsel %vm53, %v40, 0
  %v100 = vsel %vm53, %v41, 0
  %102 = vmatprep.subr.mxu0 0.0
  %103 = vmatpush1.msra.mxu0 %v42
  %104 = vmatprep.subr.mxu0 0.0
  %105 = vmatpush1.msra.mxu0 %v43
  %106 = vmatprep.subr.mxu0 0.0
  %107 = vmatpush1.msra.mxu0 %v44
  %108 = vmatprep.subr.mxu0 0.0
  %109 = vmatpush1.msra.mxu0 %v45
  %110 = vmatprep.subr.mxu0 0.0
  %111 = vmatpush1.msra.mxu0 0.0
  %112 = vmatprep.subr.mxu0 0.0
  %113 = vmatpush1.msra.mxu0 0.0
  %114 = vmatprep.subr.mxu0 0.0
  %115 = vmatpush1.msra.mxu0 0.0
  %116 = vmatprep.subr.mxu0 0.0
  %117 = vmatpush1.msra.mxu0 0.0
  %118 = vmatprep.subr.mxu0 0.0
  %119 = vmatpush1.msra.mxu0 0.0
  %120 = vmatprep.subr.mxu0 0.0
  %121 = vmatpush1.msra.mxu0 0.0
  %122 = vmatprep.subr.mxu0 0.0
  %123 = vmatpush1.msra.mxu0 0.0
  %124 = vmatprep.subr.mxu0 0.0
  %125 = vmatpush1.msra.mxu0 0.0
  %126 = vmatprep.subr.mxu0 0.0
  %127 = vmatpush1.msra.mxu0 0.0
  %128 = vmatprep.subr.mxu0 0.0
  %129 = vmatpush1.msra.mxu0 0.0
  %130 = vmatprep.subr.mxu0 0.0
  %131 = vmatpush1.msra.mxu0 0.0
  %132 = vmatprep.subr.mxu0 0.0
  %133 = vmatpush1.msra.mxu0 0.0
  %134 = vmatprep.subr.mxu0 0.0
  %135 = vmatpush1.msra.mxu0 0.0
  %136 = vmatprep.subr.mxu0 0.0
  %137 = vmatpush1.msra.mxu0 0.0
  %138 = vmatprep.subr.mxu0 0.0
  %139 = vmatpush1.msra.mxu0 0.0
  %140 = vmatprep.subr.mxu0 0.0
  %141 = vmatpush1.msra.mxu0 0.0
  %142 = vmatprep.subr.mxu0 0.0
  %143 = vmatpush1.msra.mxu0 0.0
  %144 = vmatprep.subr.mxu0 0.0
  %145 = vmatpush1.msra.mxu0 0.0
  %146 = vmatprep.subr.mxu0 0.0
  %147 = vmatpush1.msra.mxu0 0.0
  %148 = vmatprep.subr.mxu0 0.0
  %149 = vmatpush1.msra.mxu0 0.0
  %150 = vmatprep.subr.mxu0 0.0
  %151 = vmatpush1.msra.mxu0 0.0
  %152 = vmatprep.subr.mxu0 0.0
  %153 = vmatpush1.msra.mxu0 0.0
  %154 = vmatprep.subr.mxu0 0.0
  %155 = vmatpush1.msra.mxu0 0.0
  %156 = vmatprep.subr.mxu0 0.0
  %157 = vmatpush1.msra.mxu0 0.0
  %158 = vmatprep.subr.mxu0 0.0
  %159 = vmatpush1.msra.mxu0 0.0
  %160 = vmatprep.subr.mxu0 0.0
  %161 = vmatpush1.msra.mxu0 0.0
  %162 = vmatprep.subr.mxu0 0.0
  %163 = vmatpush1.msra.mxu0 0.0
  %164 = vmatprep.subr.mxu0 0.0
  %165 = vmatpush1.msra.mxu0 0.0
  %166 = vmatprep.mubr.f32.mxu0 0.0
  %167 = vmatmul.mubr.f32.gmra.mrb[0].mxu0 %v55
  %v168 = vpop.f32.mrb[0].mxu0
  %v169 = vadd.f32 %v51, %v168
  %v170 = vpop.f32.mrb[0].mxu0
  %171 = vmatprep.mubr.f32.mxu0 0.0
  %172 = vmatmul.mubr.f32.gmra.mrb[0].mxu0 %v58
  %v173 = vpop.f32.mrb[0].mxu0
  %v174 = vadd.f32 %v51, %v173
  %v175 = vpop.f32.mrb[0].mxu0
  %176 = vmatprep.mubr.f32.mxu0 0.0
  %177 = vmatmul.mubr.f32.gmra.mrb[0].mxu0 %v61
  %v178 = vpop.f32.mrb[0].mxu0
  %v179 = vadd.f32 %v51, %v178
  %v180 = vpop.f32.mrb[0].mxu0
  %181 = vmatprep.mubr.f32.mxu0 0.0
  %182 = vmatmul.mubr.f32.gmra.mrb[0].mxu0 %v64
  %v183 = vpop.f32.mrb[0].mxu0
  %v184 = vadd.f32 %v51, %v183
  %v185 = vpop.f32.mrb[0].mxu0
  %186 = vmatprep.mubr.f32.mxu0 0.0
  %187 = vmatmul.mubr.f32.gmra.mrb[0].mxu0 %v67
  %v188 = vpop.f32.mrb[0].mxu0
  %v189 = vadd.f32 %v51, %v188
  %v190 = vpop.f32.mrb[0].mxu0
  %191 = vmatprep.mubr.f32.mxu0 0.0
  %192 = vmatmul.mubr.f32.gmra.mrb[0].mxu0 %v70
  %v193 = vpop.f32.mrb[0].mxu0
  %v194 = vadd.f32 %v51, %v193
  %v195 = vpop.f32.mrb[0].mxu0
  %196 = vmatprep.mubr.f32.mxu0 0.0
  %197 = vmatmul.mubr.f32.gmra.mrb[0].mxu0 %v73
  %v198 = vpop.f32.mrb[0].mxu0
  %v199 = vadd.f32 %v51, %v198
  %v200 = vpop.f32.mrb[0].mxu0
  %201 = vmatprep.mubr.f32.mxu0 0.0
  %202 = vmatmul.mubr.f32.gmra.mrb[0].mxu0 %v76
  %v203 = vpop.f32.mrb[0].mxu0
  %v204 = vadd.f32 %v51, %v203
  %v205 = vpop.f32.mrb[0].mxu0
  %206 = vmatprep.mubr.f32.mxu0 0.0
  %207 = vmatmul.mubr.f32.gmra.mrb[0].mxu0 %v79
  %v208 = vpop.f32.mrb[0].mxu0
  %v209 = vadd.f32 %v51, %v208
  %v210 = vpop.f32.mrb[0].mxu0
  %211 = vmatprep.mubr.f32.mxu0 0.0
  %212 = vmatmul.mubr.f32.gmra.mrb[0].mxu0 %v82
  %v213 = vpop.f32.mrb[0].mxu0
  %v214 = vadd.f32 %v51, %v213
  %v215 = vpop.f32.mrb[0].mxu0
  %216 = vmatprep.mubr.f32.mxu0 0.0
  %217 = vmatmul.mubr.f32.gmra.mrb[0].mxu0 %v85
  %v218 = vpop.f32.mrb[0].mxu0
  %v219 = vadd.f32 %v51, %v218
  %v220 = vpop.f32.mrb[0].mxu0
  %221 = vmatprep.mubr.f32.mxu0 0.0
  %222 = vmatmul.mubr.f32.gmra.mrb[0].mxu0 %v88
  %v223 = vpop.f32.mrb[0].mxu0
  %v224 = vadd.f32 %v51, %v223
  %v225 = vpop.f32.mrb[0].mxu0
  %226 = vmatprep.mubr.f32.mxu0 0.0
  %227 = vmatmul.mubr.f32.gmra.mrb[0].mxu0 %v91
  %v228 = vpop.f32.mrb[0].mxu0
  %v229 = vadd.f32 %v51, %v228
  %v230 = vpop.f32.mrb[0].mxu0
  %231 = vmatprep.mubr.f32.mxu0 0.0
  %232 = vmatmul.mubr.f32.gmra.mrb[0].mxu0 %v94
  %v233 = vpop.f32.mrb[0].mxu0
  %v234 = vadd.f32 %v51, %v233
  %v235 = vpop.f32.mrb[0].mxu0
  %236 = vmatprep.mubr.f32.mxu0 0.0
  %237 = vmatmul.mubr.f32.gmra.mrb[0].mxu0 %v97
  %v238 = vpop.f32.mrb[0].mxu0
  %v239 = vadd.f32 %v51, %v238
  %v240 = vpop.f32.mrb[0].mxu0
  %241 = vmatprep.mubr.f32.mxu0 0.0
  %242 = vmatmul.mubr.f32.gmra.mrb[0].mxu0 %v100
  %v243 = vpop.f32.mrb[0].mxu0
  %v244 = vadd.f32 %v51, %v243
  %v245 = vpop.f32.mrb[0].mxu0
  %246 = vdwg.mxu0
  %v247 = vtanh.pop %v169
  %v248 = vtanh.pop %v174
  %v249 = vtanh.pop %v179
  %v250 = vtanh.pop %v184
  %v251 = vtanh.pop %v189
  %v252 = vtanh.pop %v194
  %v253 = vtanh.pop %v199
  %v254 = vtanh.pop %v204
  %v255 = vtanh.pop %v209
  %v256 = vtanh.pop %v214
  %v257 = vtanh.pop %v219
  %v258 = vtanh.pop %v224
  %v259 = vtanh.pop %v229
  %v260 = vtanh.pop %v234
  %v261 = vtanh.pop %v239
  %v262 = vtanh.pop %v244
  %v263 = vld [vmem:[%s3] sm:$0xff]
  %v264 = vld [vmem:[%s3 + $0x8] sm:$0xff]
  %v265 = vld [vmem:[%s3 + $0x10] sm:$0xff]
  %v266 = vld [vmem:[%s3 + $0x18] sm:$0xff]
  %v267 = vld [vmem:[%s3 + $0x20] sm:$0xff]
  %v268 = vld [vmem:[%s3 + $0x28] sm:$0xff]
  %v269 = vld [vmem:[%s3 + $0x30] sm:$0xff]
  %v270 = vld [vmem:[%s3 + $0x38] sm:$0xff]
  %v271 = vld [vmem:[%s3 + $0x40] sm:$0xff]
  %v272 = vld [vmem:[%s3 + $0x48] sm:$0xff]
  %v273 = vld [vmem:[%s3 + $0x50] sm:$0xff]
  %v274 = vld [vmem:[%s3 + $0x58] sm:$0xff]
  %v275 = vld [vmem:[%s3 + $0x60] sm:$0xff]
  %v276 = vld [vmem:[%s3 + $0x68] sm:$0xff]
  %v277 = vld [vmem:[%s3 + $0x70] sm:$0xff]
  %v278 = vld [vmem:[%s3 + $0x78] sm:$0xff]
  %v279 = vld [vmem:[%s4] sm:$0x1]
  %v281 = vlaneseq
  %v282 = vshrl.u32 %v281, 7
  %v283 = vsub.s32 0, %v282
  %v284 = vrot.slane %v279, %v283
  %286 = vmatprep.subr.mxu0 0.0
  %287 = vmatpush1.msra.mxu0 %v263
  %288 = vmatprep.subr.mxu0 0.0
  %289 = vmatpush1.msra.mxu0 %v264
  %290 = vmatprep.subr.mxu0 0.0
  %291 = vmatpush1.msra.mxu0 %v265
  %292 = vmatprep.subr.mxu0 0.0
  %293 = vmatpush1.msra.mxu0 %v266
  %294 = vmatprep.subr.mxu0 0.0
  %295 = vmatpush1.msra.mxu0 %v267
  %296 = vmatprep.subr.mxu0 0.0
  %297 = vmatpush1.msra.mxu0 %v268
  %298 = vmatprep.subr.mxu0 0.0
  %299 = vmatpush1.msra.mxu0 %v269
  %300 = vmatprep.subr.mxu0 0.0
  %301 = vmatpush1.msra.mxu0 %v270
  %302 = vmatprep.subr.mxu0 0.0
  %303 = vmatpush1.msra.mxu0 %v271
  %304 = vmatprep.subr.mxu0 0.0
  %305 = vmatpush1.msra.mxu0 %v272
  %306 = vmatprep.subr.mxu0 0.0
  %307 = vmatpush1.msra.mxu0 %v273
  %308 = vmatprep.subr.mxu0 0.0
  %309 = vmatpush1.msra.mxu0 %v274
  %310 = vmatprep.subr.mxu0 0.0
  %311 = vmatpush1.msra.mxu0 %v275
  %312 = vmatprep.subr.mxu0 0.0
  %313 = vmatpush1.msra.mxu0 %v276
  %314 = vmatprep.subr.mxu0 0.0
  %315 = vmatpush1.msra.mxu0 %v277
  %316 = vmatprep.subr.mxu0 0.0
  %317 = vmatpush1.msra.mxu0 %v278
  %318 = vmatprep.subr.mxu0 0.0
  %319 = vmatpush1.msra.mxu0 0.0
  %320 = vmatprep.subr.mxu0 0.0
  %321 = vmatpush1.msra.mxu0 0.0
  %322 = vmatprep.subr.mxu0 0.0
  %323 = vmatpush1.msra.mxu0 0.0
  %324 = vmatprep.subr.mxu0 0.0
  %325 = vmatpush1.msra.mxu0 0.0
  %326 = vmatprep.subr.mxu0 0.0
  %327 = vmatpush1.msra.mxu0 0.0
  %328 = vmatprep.subr.mxu0 0.0
  %329 = vmatpush1.msra.mxu0 0.0
  %330 = vmatprep.subr.mxu0 0.0
  %331 = vmatpush1.msra.mxu0 0.0
  %332 = vmatprep.subr.mxu0 0.0
  %333 = vmatpush1.msra.mxu0 0.0
  %334 = vmatprep.subr.mxu0 0.0
  %335 = vmatpush1.msra.mxu0 0.0
  %336 = vmatprep.subr.mxu0 0.0
  %337 = vmatpush1.msra.mxu0 0.0
  %338 = vmatprep.subr.mxu0 0.0
  %339 = vmatpush1.msra.mxu0 0.0
  %340 = vmatprep.subr.mxu0 0.0
  %341 = vmatpush1.msra.mxu0 0.0
  %342 = vmatprep.subr.mxu0 0.0
  %343 = vmatpush1.msra.mxu0 0.0
  %344 = vmatprep.subr.mxu0 0.0
  %345 = vmatpush1.msra.mxu0 0.0
  %346 = vmatprep.subr.mxu0 0.0
  %347 = vmatpush1.msra.mxu0 0.0
  %348 = vmatprep.subr.mxu0 0.0
  %349 = vmatpush1.msra.mxu0 0.0
  %350 = vmatprep.mubr.f32.mxu0 0.0
  %351 = vmatmul.mubr.f32.gmra.mrb[0].mxu0 %v247
  %v352 = vpop.f32.mrb[0].mxu0
  %v353 = vadd.f32 %v284, %v352
  %v354 = vpop.f32.mrb[0].mxu0
  %355 = vmatprep.mubr.f32.mxu0 0.0
  %356 = vmatmul.mubr.f32.gmra.mrb[0].mxu0 %v248
  %v357 = vpop.f32.mrb[0].mxu0
  %v358 = vadd.f32 %v284, %v357
  %v359 = vpop.f32.mrb[0].mxu0
  %360 = vmatprep.mubr.f32.mxu0 0.0
  %361 = vmatmul.mubr.f32.gmra.mrb[0].mxu0 %v249
  %v362 = vpop.f32.mrb[0].mxu0
  %v363 = vadd.f32 %v284, %v362
  %v364 = vpop.f32.mrb[0].mxu0
  %365 = vmatprep.mubr.f32.mxu0 0.0
  %366 = vmatmul.mubr.f32.gmra.mrb[0].mxu0 %v250
  %v367 = vpop.f32.mrb[0].mxu0
  %v368 = vadd.f32 %v284, %v367
  %v369 = vpop.f32.mrb[0].mxu0
  %370 = vmatprep.mubr.f32.mxu0 0.0
  %371 = vmatmul.mubr.f32.gmra.mrb[0].mxu0 %v251
  %v372 = vpop.f32.mrb[0].mxu0
  %v373 = vadd.f32 %v284, %v372
  %v374 = vpop.f32.mrb[0].mxu0
  %375 = vmatprep.mubr.f32.mxu0 0.0
  %376 = vmatmul.mubr.f32.gmra.mrb[0].mxu0 %v252
  %v377 = vpop.f32.mrb[0].mxu0
  %v378 = vadd.f32 %v284, %v377
  %v379 = vpop.f32.mrb[0].mxu0
  %380 = vmatprep.mubr.f32.mxu0 0.0
  %381 = vmatmul.mubr.f32.gmra.mrb[0].mxu0 %v253
  %v382 = vpop.f32.mrb[0].mxu0
  %v383 = vadd.f32 %v284, %v382
  %v384 = vpop.f32.mrb[0].mxu0
  %385 = vmatprep.mubr.f32.mxu0 0.0
  %386 = vmatmul.mubr.f32.gmra.mrb[0].mxu0 %v254
  %v387 = vpop.f32.mrb[0].mxu0
  %v388 = vadd.f32 %v284, %v387
  %v389 = vpop.f32.mrb[0].mxu0
  %390 = vmatprep.mubr.f32.mxu0 0.0
  %391 = vmatmul.mubr.f32.gmra.mrb[0].mxu0 %v255
  %v392 = vpop.f32.mrb[0].mxu0
  %v393 = vadd.f32 %v284, %v392
  %v394 = vpop.f32.mrb[0].mxu0
  %395 = vmatprep.mubr.f32.mxu0 0.0
  %396 = vmatmul.mubr.f32.gmra.mrb[0].mxu0 %v256
  %v397 = vpop.f32.mrb[0].mxu0
  %v398 = vadd.f32 %v284, %v397
  %v399 = vpop.f32.mrb[0].mxu0
  %400 = vmatprep.mubr.f32.mxu0 0.0
  %401 = vmatmul.mubr.f32.gmra.mrb[0].mxu0 %v257
  %v402 = vpop.f32.mrb[0].mxu0
  %v403 = vadd.f32 %v284, %v402
  %v404 = vpop.f32.mrb[0].mxu0
  %405 = vmatprep.mubr.f32.mxu0 0.0
  %406 = vmatmul.mubr.f32.gmra.mrb[0].mxu0 %v258
  %v407 = vpop.f32.mrb[0].mxu0
  %v408 = vadd.f32 %v284, %v407
  %v409 = vpop.f32.mrb[0].mxu0
  %410 = vmatprep.mubr.f32.mxu0 0.0
  %411 = vmatmul.mubr.f32.gmra.mrb[0].mxu0 %v259
  %v412 = vpop.f32.mrb[0].mxu0
  %v413 = vadd.f32 %v284, %v412
  %v414 = vpop.f32.mrb[0].mxu0
  %415 = vmatprep.mubr.f32.mxu0 0.0
  %416 = vmatmul.mubr.f32.gmra.mrb[0].mxu0 %v260
  %v417 = vpop.f32.mrb[0].mxu0
  %v418 = vadd.f32 %v284, %v417
  %v419 = vpop.f32.mrb[0].mxu0
  %420 = vmatprep.mubr.f32.mxu0 0.0
  %421 = vmatmul.mubr.f32.gmra.mrb[0].mxu0 %v261
  %v422 = vpop.f32.mrb[0].mxu0
  %v423 = vadd.f32 %v284, %v422
  %v424 = vpop.f32.mrb[0].mxu0
  %425 = vmatprep.mubr.f32.mxu0 0.0
  %426 = vmatmul.mubr.f32.gmra.mrb[0].mxu0 %v262
  %v427 = vpop.f32.mrb[0].mxu0
  %v428 = vadd.f32 %v284, %v427
  %v429 = vpop.f32.mrb[0].mxu0
  %430 = vdwg.mxu0
  %v431 = vtanh.pop %v353
  %v432 = vtanh.pop %v358
  %v433 = vtanh.pop %v363
  %v434 = vtanh.pop %v368
  %v435 = vtanh.pop %v373
  %v436 = vtanh.pop %v378
  %v437 = vtanh.pop %v383
  %v438 = vtanh.pop %v388
  %v439 = vtanh.pop %v393
  %v440 = vtanh.pop %v398
  %v441 = vtanh.pop %v403
  %v442 = vtanh.pop %v408
  %v443 = vtanh.pop %v413
  %v444 = vtanh.pop %v418
  %v445 = vtanh.pop %v423
  %v446 = vtanh.pop %v428
  %v447 = vld [vmem:[%s5] sm:$0xff]
  %v448 = vld [vmem:[%s5 + $0x8] sm:$0xff]
  %v449 = vld [vmem:[%s5 + $0x10] sm:$0xff]
  %v450 = vld [vmem:[%s5 + $0x18] sm:$0xff]
  %v451 = vld [vmem:[%s5 + $0x20] sm:$0xff]
  %v452 = vld [vmem:[%s5 + $0x28] sm:$0xff]
  %v453 = vld [vmem:[%s5 + $0x30] sm:$0xff]
  %v454 = vld [vmem:[%s5 + $0x38] sm:$0xff]
  %v455 = vld [vmem:[%s5 + $0x40] sm:$0xff]
  %v456 = vld [vmem:[%s5 + $0x48] sm:$0xff]
  %v457 = vld [vmem:[%s5 + $0x50] sm:$0xff]
  %v458 = vld [vmem:[%s5 + $0x58] sm:$0xff]
  %v459 = vld [vmem:[%s5 + $0x60] sm:$0xff]
  %v460 = vld [vmem:[%s5 + $0x68] sm:$0xff]
  %v461 = vld [vmem:[%s5 + $0x70] sm:$0xff]
  %v462 = vld [vmem:[%s5 + $0x78] sm:$0xff]
  %v463 = vld [vmem:[%s6] sm:$0x1]
  %v465 = vlaneseq
  %v466 = vshrl.u32 %v465, 7
  %v467 = vsub.s32 0, %v466
  %v468 = vrot.slane %v463, %v467
  %470 = vmatprep.subr.mxu0 0.0
  %471 = vmatpush1.msra.mxu0 %v447
  %472 = vmatprep.subr.mxu0 0.0
  %473 = vmatpush1.msra.mxu0 %v448
  %474 = vmatprep.subr.mxu0 0.0
  %475 = vmatpush1.msra.mxu0 %v449
  %476 = vmatprep.subr.mxu0 0.0
  %477 = vmatpush1.msra.mxu0 %v450
  %478 = vmatprep.subr.mxu0 0.0
  %479 = vmatpush1.msra.mxu0 %v451
  %480 = vmatprep.subr.mxu0 0.0
  %481 = vmatpush1.msra.mxu0 %v452
  %482 = vmatprep.subr.mxu0 0.0
  %483 = vmatpush1.msra.mxu0 %v453
  %484 = vmatprep.subr.mxu0 0.0
  %485 = vmatpush1.msra.mxu0 %v454
  %486 = vmatprep.subr.mxu0 0.0
  %487 = vmatpush1.msra.mxu0 %v455
  %488 = vmatprep.subr.mxu0 0.0
  %489 = vmatpush1.msra.mxu0 %v456
  %490 = vmatprep.subr.mxu0 0.0
  %491 = vmatpush1.msra.mxu0 %v457
  %492 = vmatprep.subr.mxu0 0.0
  %493 = vmatpush1.msra.mxu0 %v458
  %494 = vmatprep.subr.mxu0 0.0
  %495 = vmatpush1.msra.mxu0 %v459
  %496 = vmatprep.subr.mxu0 0.0
  %497 = vmatpush1.msra.mxu0 %v460
  %498 = vmatprep.subr.mxu0 0.0
  %499 = vmatpush1.msra.mxu0 %v461
  %500 = vmatprep.subr.mxu0 0.0
  %501 = vmatpush1.msra.mxu0 %v462
  %502 = vmatprep.subr.mxu0 0.0
  %503 = vmatpush1.msra.mxu0 0.0
  %504 = vmatprep.subr.mxu0 0.0
  %505 = vmatpush1.msra.mxu0 0.0
  %506 = vmatprep.subr.mxu0 0.0
  %507 = vmatpush1.msra.mxu0 0.0
  %508 = vmatprep.subr.mxu0 0.0
  %509 = vmatpush1.msra.mxu0 0.0
  %510 = vmatprep.subr.mxu0 0.0
  %511 = vmatpush1.msra.mxu0 0.0
  %512 = vmatprep.subr.mxu0 0.0
  %513 = vmatpush1.msra.mxu0 0.0
  %514 = vmatprep.subr.mxu0 0.0
  %515 = vmatpush1.msra.mxu0 0.0
  %516 = vmatprep.subr.mxu0 0.0
  %517 = vmatpush1.msra.mxu0 0.0
  %518 = vmatprep.subr.mxu0 0.0
  %519 = vmatpush1.msra.mxu0 0.0
  %520 = vmatprep.subr.mxu0 0.0
  %521 = vmatpush1.msra.mxu0 0.0
  %522 = vmatprep.subr.mxu0 0.0
  %523 = vmatpush1.msra.mxu0 0.0
  %524 = vmatprep.subr.mxu0 0.0
  %525 = vmatpush1.msra.mxu0 0.0
  %526 = vmatprep.subr.mxu0 0.0
  %527 = vmatpush1.msra.mxu0 0.0
  %528 = vmatprep.subr.mxu0 0.0
  %529 = vmatpush1.msra.mxu0 0.0
  %530 = vmatprep.subr.mxu0 0.0
  %531 = vmatpush1.msra.mxu0 0.0
  %532 = vmatprep.subr.mxu0 0.0
  %533 = vmatpush1.msra.mxu0 0.0
  %534 = vmatprep.mubr.f32.mxu0 0.0
  %535 = vmatmul.mubr.f32.gmra.mrb[0].mxu0 %v431
  %v536 = vpop.f32.mrb[0].mxu0
  %v537 = vadd.f32 %v468, %v536
  %v538 = vpop.f32.mrb[0].mxu0
  %539 = vmatprep.mubr.f32.mxu0 0.0
  %540 = vmatmul.mubr.f32.gmra.mrb[0].mxu0 %v432
  %v541 = vpop.f32.mrb[0].mxu0
  %v542 = vadd.f32 %v468, %v541
  %v543 = vpop.f32.mrb[0].mxu0
  %544 = vmatprep.mubr.f32.mxu0 0.0
  %545 = vmatmul.mubr.f32.gmra.mrb[0].mxu0 %v433
  %v546 = vpop.f32.mrb[0].mxu0
  %v547 = vadd.f32 %v468, %v546
  %v548 = vpop.f32.mrb[0].mxu0
  %549 = vmatprep.mubr.f32.mxu0 0.0
  %550 = vmatmul.mubr.f32.gmra.mrb[0].mxu0 %v434
  %v551 = vpop.f32.mrb[0].mxu0
  %v552 = vadd.f32 %v468, %v551
  %v553 = vpop.f32.mrb[0].mxu0
  %554 = vmatprep.mubr.f32.mxu0 0.0
  %555 = vmatmul.mubr.f32.gmra.mrb[0].mxu0 %v435
  %v556 = vpop.f32.mrb[0].mxu0
  %v557 = vadd.f32 %v468, %v556
  %v558 = vpop.f32.mrb[0].mxu0
  %559 = vmatprep.mubr.f32.mxu0 0.0
  %560 = vmatmul.mubr.f32.gmra.mrb[0].mxu0 %v436
  %v561 = vpop.f32.mrb[0].mxu0
  %v562 = vadd.f32 %v468, %v561
  %v563 = vpop.f32.mrb[0].mxu0
  %564 = vmatprep.mubr.f32.mxu0 0.0
  %565 = vmatmul.mubr.f32.gmra.mrb[0].mxu0 %v437
  %v566 = vpop.f32.mrb[0].mxu0
  %v567 = vadd.f32 %v468, %v566
  %v568 = vpop.f32.mrb[0].mxu0
  %569 = vmatprep.mubr.f32.mxu0 0.0
  %570 = vmatmul.mubr.f32.gmra.mrb[0].mxu0 %v438
  %v571 = vpop.f32.mrb[0].mxu0
  %v572 = vadd.f32 %v468, %v571
  %v573 = vpop.f32.mrb[0].mxu0
  %574 = vmatprep.mubr.f32.mxu0 0.0
  %575 = vmatmul.mubr.f32.gmra.mrb[0].mxu0 %v439
  %v576 = vpop.f32.mrb[0].mxu0
  %v577 = vadd.f32 %v468, %v576
  %v578 = vpop.f32.mrb[0].mxu0
  %579 = vmatprep.mubr.f32.mxu0 0.0
  %580 = vmatmul.mubr.f32.gmra.mrb[0].mxu0 %v440
  %v581 = vpop.f32.mrb[0].mxu0
  %v582 = vadd.f32 %v468, %v581
  %v583 = vpop.f32.mrb[0].mxu0
  %584 = vmatprep.mubr.f32.mxu0 0.0
  %585 = vmatmul.mubr.f32.gmra.mrb[0].mxu0 %v441
  %v586 = vpop.f32.mrb[0].mxu0
  %v587 = vadd.f32 %v468, %v586
  %v588 = vpop.f32.mrb[0].mxu0
  %589 = vmatprep.mubr.f32.mxu0 0.0
  %590 = vmatmul.mubr.f32.gmra.mrb[0].mxu0 %v442
  %v591 = vpop.f32.mrb[0].mxu0
  %v592 = vadd.f32 %v468, %v591
  %v593 = vpop.f32.mrb[0].mxu0
  %594 = vmatprep.mubr.f32.mxu0 0.0
  %595 = vmatmul.mubr.f32.gmra.mrb[0].mxu0 %v443
  %v596 = vpop.f32.mrb[0].mxu0
  %v597 = vadd.f32 %v468, %v596
  %v598 = vpop.f32.mrb[0].mxu0
  %599 = vmatprep.mubr.f32.mxu0 0.0
  %600 = vmatmul.mubr.f32.gmra.mrb[0].mxu0 %v444
  %v601 = vpop.f32.mrb[0].mxu0
  %v602 = vadd.f32 %v468, %v601
  %v603 = vpop.f32.mrb[0].mxu0
  %604 = vmatprep.mubr.f32.mxu0 0.0
  %605 = vmatmul.mubr.f32.gmra.mrb[0].mxu0 %v445
  %v606 = vpop.f32.mrb[0].mxu0
  %v607 = vadd.f32 %v468, %v606
  %v608 = vpop.f32.mrb[0].mxu0
  %609 = vmatprep.mubr.f32.mxu0 0.0
  %610 = vmatmul.mubr.f32.gmra.mrb[0].mxu0 %v446
  %v611 = vpop.f32.mrb[0].mxu0
  %v612 = vadd.f32 %v468, %v611
  %v613 = vpop.f32.mrb[0].mxu0
  %614 = vdwg.mxu0
  %615 = vst [vmem:[%s7] sm:$0xff] %v537
  %616 = vst [vmem:[%s7 + $0x8] sm:$0xff] %v542
  %617 = vst [vmem:[%s7 + $0x10] sm:$0xff] %v547
  %618 = vst [vmem:[%s7 + $0x18] sm:$0xff] %v552
  %619 = vst [vmem:[%s7 + $0x20] sm:$0xff] %v557
  %620 = vst [vmem:[%s7 + $0x28] sm:$0xff] %v562
  %621 = vst [vmem:[%s7 + $0x30] sm:$0xff] %v567
  %622 = vst [vmem:[%s7 + $0x38] sm:$0xff] %v572
  %623 = vst [vmem:[%s7 + $0x40] sm:$0xff] %v577
  %624 = vst [vmem:[%s7 + $0x48] sm:$0xff] %v582
  %625 = vst [vmem:[%s7 + $0x50] sm:$0xff] %v587
  %626 = vst [vmem:[%s7 + $0x58] sm:$0xff] %v592
  %627 = vst [vmem:[%s7 + $0x60] sm:$0xff] %v597
  %628 = vst [vmem:[%s7 + $0x68] sm:$0xff] %v602
  %629 = vst [vmem:[%s7 + $0x70] sm:$0xff] %v607
  %630 = vst [vmem:[%s7 + $0x78] sm:$0xff] %v612
  // Predicated region
  $region30: #{qfunc_forward.1} parent=0 // pred_check
    _
  $region31: #{qfunc_forward.1} parent=0 // pred_check_branch
    %632 = sbr.rel (0) target = $region33
  $region32: #{qfunc_forward.1} parent=0 // pred_region
    _
  $region33: #{qfunc_forward.1} parent=0 // pred_fallthru
    _
  // Predicated region
  $region34: #{qfunc_forward.1} parent=0 // pred_check
    _
  $region35: #{qfunc_forward.1} parent=0 // pred_check_branch
    %634 = sbr.rel (0) target = $region37
  $region36: #{qfunc_forward.1} parent=0 // pred_region
    _
  $region37: #{qfunc_forward.1} parent=0 // pred_fallthru
    _

</llo_original>
